<compile_context>
chip_gen: v7x
topology: tpu7x:2x2x1
jax: 0.10.0
libtpu: 0.0.40
codegen_flags: <defaults>
</compile_context>

<pallas_src>
import functools

import jax
import jax.numpy as jnp
from jax.experimental import pallas as pl
from jax.experimental.pallas import tpu as pltpu


def _round_up(x, m):
    return ((x + m - 1) // m) * m


def _principle_evaluator_kernel(hs_ref, mask_ref,
                                w1_ref, b1_ref, w2_ref, b2_ref,
                                wp_ref, bp_ref,
                                scores_ref, mean_ref,
                                sum_acc, cnt_acc,
                                *, num_principles):
    s_idx = pl.program_id(1)

    # ---- init accumulators at the start of each batch tile's seq sweep ------
    @pl.when(s_idx == 0)
    def _():
        sum_acc[...] = jnp.zeros_like(sum_acc)
        cnt_acc[...] = jnp.zeros_like(cnt_acc)

    # ---- streamed masked sum over this seq tile ------------------------------
    hs = hs_ref[...].astype(jnp.float32)            # [Bt, TS, H]
    m = mask_ref[...].astype(jnp.float32)           # [Bt, TS, 1]
    masked = hs * m                                 # lane broadcast multiply
    sum_acc[...] += jnp.sum(masked, axis=1)         # [Bt, H] f32
    cnt_acc[...] += jnp.sum(m, axis=1)              # [Bt, 1] f32

    # ---- finalize: pooled divide + MLP + heads, once per batch tile ----------
    @pl.when(s_idx == pl.num_programs(1) - 1)
    def _():
        # NOTE: a fully-masked row divides by zero -> NaN, matching PyTorch.
        pooled = sum_acc[...] / cnt_acc[...]        # [Bt, H] f32

        w_dtype = w1_ref.dtype
        h1 = jnp.dot(pooled.astype(w_dtype), w1_ref[...],
                     preferred_element_type=jnp.float32) + b1_ref[...]
        # exact (erf) GELU; Dropout is identity in eval mode.
        inv_sqrt2 = jnp.float32(0.7071067811865476)
        h1 = 0.5 * h1 * (1.0 + jax.lax.erf(h1 * inv_sqrt2))
        h2 = jnp.dot(h1.astype(w_dtype), w2_ref[...],
                     preferred_element_type=jnp.float32) + b2_ref[...]

        logits = jnp.dot(h2.astype(w_dtype), wp_ref[...],
                         preferred_element_type=jnp.float32) + bp_ref[...]
        scores = jax.nn.sigmoid(logits)             # [Bt, P_pad]
        scores_ref[...] = scores.astype(scores_ref.dtype)

        # mean over the real principles only (exclude zero-padded columns,
        # which carry sigmoid(0) = 0.5).
        col = jax.lax.broadcasted_iota(jnp.int32, scores.shape, 1)
        valid = (col < num_principles).astype(jnp.float32)
        mean_ref[...] = (jnp.sum(scores * valid, axis=1, keepdims=True)
                         / jnp.float32(num_principles)).astype(mean_ref.dtype)


def _vmem_block_bytes(shape, dtype):
    shape = list(shape)
    if len(shape) >= 2:
        shape[-1] = _round_up(shape[-1], 128)
        shape[-2] = _round_up(shape[-2], 8)
    else:
        shape[-1] = _round_up(shape[-1], 128)
    n = 1
    for d in shape:
        n *= d
    return n * jnp.dtype(dtype).itemsize


def principle_evaluator_forward(hidden_states, attention_mask,
                                w1, b1, w2, b2, wp, bp,
                                *, seq_block=512, batch_block=8):
    """hidden_states: [B, S, H]; attention_mask: [B, S] or None.

    Linear weights are stored [in, out] (transposed vs torch's .weight) so the
    kernel computes x @ W + b.  wp is the stacked principle-head matrix [H, P].
    """
    B, S, H = hidden_states.shape
    P = wp.shape[1]
    in_dtype = hidden_states.dtype

    if attention_mask is None:
        attention_mask = jnp.ones((B, S), dtype=in_dtype)
    mask3 = attention_mask.astype(in_dtype).reshape(B, S, 1)

    # ---- tile-size selection (sized for the smallest VMEM: v7x 64 MiB/TC) ----
    itemsize = jnp.dtype(in_dtype).itemsize
    Bt = B if B <= batch_block else _round_up(min(batch_block, B), 8)
    ts = min(seq_block, _round_up(S, 8))
    ts = max(_round_up(ts, 8), 8)
    while ts > 8 and Bt * ts * H * itemsize > (8 << 20):   # <=8 MiB per buffer
        ts = max(_round_up(ts // 2, 8), 8)

    S_pad = _round_up(S, ts)
    B_pad = _round_up(B, Bt)
    P_pad = _round_up(P, 128)     # lane-dense head matmul / score store

    hs_p, m_p = hidden_states, mask3
    if S_pad != S:
        hs_p = jnp.pad(hs_p, ((0, 0), (0, S_pad - S), (0, 0)))
        m_p = jnp.pad(m_p, ((0, 0), (0, S_pad - S), (0, 0)))   # zero mask
    if B_pad != B:
        hs_p = jnp.pad(hs_p, ((0, B_pad - B), (0, 0), (0, 0)))
        m_p = jnp.pad(m_p, ((0, B_pad - B), (0, 0), (0, 0)))

    # Biases as f32 [1, N] rows; heads padded to P_pad with zeros.
    b1_2d = b1.astype(jnp.float32).reshape(1, H)
    b2_2d = b2.astype(jnp.float32).reshape(1, H)
    wp_p = jnp.pad(wp, ((0, 0), (0, P_pad - P)))
    bp_2d = jnp.pad(bp.astype(jnp.float32), (0, P_pad - P)).reshape(1, P_pad)

    nb, ns = B_pad // Bt, S_pad // ts
    w_dtype = w1.dtype

    # ---- explicit VMEM budget with headroom ----------------------------------
    est = (2 * (_vmem_block_bytes((Bt, ts, H), in_dtype)
                + _vmem_block_bytes((Bt, ts, 1), in_dtype))
           + 2 * (2 * _vmem_block_bytes((H, H), w_dtype)
                  + _vmem_block_bytes((H, P_pad), w_dtype)
                  + 2 * _vmem_block_bytes((1, H), jnp.float32)
                  + _vmem_block_bytes((1, P_pad), jnp.float32))
           + 2 * (_vmem_block_bytes((Bt, P_pad), jnp.float32)
                  + _vmem_block_bytes((Bt, 1), jnp.float32))
           + _vmem_block_bytes((Bt, H), jnp.float32)
           + _vmem_block_bytes((Bt, 1), jnp.float32))
    vmem_limit = int(min(max(2 * est, 16 << 20), 56 << 20))

    cost = pl.CostEstimate(
        flops=2 * B * S * H + 2 * B * H * (H + H + P),
        transcendentals=B * (H + P),
        bytes_accessed=(B * S * H + B * S) * itemsize
        + (2 * H * H + H * P) * jnp.dtype(w_dtype).itemsize
        + B * (P + 1) * 4,
    )

    kernel = functools.partial(_principle_evaluator_kernel, num_principles=P)

    scores_pad, mean_pad = pl.pallas_call(
        kernel,
        grid=(nb, ns),
        in_specs=[
            pl.BlockSpec((Bt, ts, H), lambda b, s: (b, s, 0)),   # hidden_states
            pl.BlockSpec((Bt, ts, 1), lambda b, s: (b, s, 0)),   # mask [B,S,1]
            pl.BlockSpec((H, H),      lambda b, s: (0, 0)),      # encoder W1
            pl.BlockSpec((1, H),      lambda b, s: (0, 0)),      # encoder b1
            pl.BlockSpec((H, H),      lambda b, s: (0, 0)),      # encoder W2
            pl.BlockSpec((1, H),      lambda b, s: (0, 0)),      # encoder b2
            pl.BlockSpec((H, P_pad),  lambda b, s: (0, 0)),      # heads W
            pl.BlockSpec((1, P_pad),  lambda b, s: (0, 0)),      # heads b
        ],
        out_specs=(
            pl.BlockSpec((Bt, P_pad), lambda b, s: (b, 0)),
            pl.BlockSpec((Bt, 1),     lambda b, s: (b, 0)),
        ),
        out_shape=(
            jax.ShapeDtypeStruct((B_pad, P_pad), jnp.float32),
            jax.ShapeDtypeStruct((B_pad, 1), jnp.float32),
        ),
        scratch_shapes=[
            pltpu.VMEM((Bt, H), jnp.float32),   # masked-sum accumulator
            pltpu.VMEM((Bt, 1), jnp.float32),   # mask-count accumulator
        ],
        compiler_params=pltpu.CompilerParams(
            dimension_semantics=("parallel", "arbitrary"),
            vmem_limit_bytes=vmem_limit),
        cost_estimate=cost,
    )(hs_p, m_p, w1, b1_2d, w2, b2_2d, wp_p, bp_2d)

    return {
        "principle_scores": scores_pad[:B, :P],   # [B, P]
        "mean_score": mean_pad[:B, 0],            # [B]
    }


def _reference_forward(hidden_states, attention_mask, w1, b1, w2, b2, wp, bp):
    """Pure-JAX reference mirroring the PyTorch module (for verification)."""
    if attention_mask is not None:
        hs = hidden_states * attention_mask[:, :, None]
        seq_len = attention_mask.sum(axis=1, keepdims=True)
    else:
        hs = hidden_states
        seq_len = hidden_states.shape[1]
    pooled = hs.sum(axis=1) / seq_len
    h = pooled @ w1 + b1
    h = jax.nn.gelu(h, approximate=False)
    h = h @ w2 + b2
    scores = jax.nn.sigmoid(h @ wp + bp)
    return scores, scores.mean(axis=1)


if __name__ == "__main__":
    # Small synthetic shapes consistent with the module's forward.
    # seq_block=16 forces several seq tiles so the streamed accumulation path
    # (init / accumulate / finalize) is exercised.
    B, S, H, P = 2, 64, 32, 12   # batch, seq_len, hidden_size, num_principles

    key = jax.random.PRNGKey(0)
    k_hs, k_w1, k_b1, k_w2, k_b2, k_wp, k_bp = jax.random.split(key, 7)

    hidden_states = jax.random.normal(k_hs, (B, S, H), dtype=jnp.float32)
    # Deterministic attention mask: row 0 keeps 40 tokens, row 1 keeps all 64.
    valid_lens = jnp.array([[40], [64]], dtype=jnp.int32)
    attention_mask = (jnp.arange(S)[None, :] < valid_lens).astype(jnp.float32)

    # Deterministic synthetic parameters (stored [in, out]).
    scale = 1.0 / jnp.sqrt(jnp.float32(H))
    w1 = jax.random.uniform(k_w1, (H, H), jnp.float32, -scale, scale)
    b1 = jax.random.uniform(k_b1, (H,),   jnp.float32, -scale, scale)
    w2 = jax.random.uniform(k_w2, (H, H), jnp.float32, -scale, scale)
    b2 = jax.random.uniform(k_b2, (H,),   jnp.float32, -scale, scale)
    wp = jax.random.uniform(k_wp, (H, P), jnp.float32, -scale, scale)
    bp = jax.random.uniform(k_bp, (P,),   jnp.float32, -scale, scale)

    out = principle_evaluator_forward(hidden_states, attention_mask,
                                      w1, b1, w2, b2, wp, bp,
                                      seq_block=16)
    jax.block_until_ready(out)

    # Verify against the pure-JAX reference.
    ref_scores, ref_mean = _reference_forward(hidden_states, attention_mask,
                                              w1, b1, w2, b2, wp, bp)
    assert out["principle_scores"].shape == (B, P)
    assert out["mean_score"].shape == (B,)
    assert jnp.allclose(out["principle_scores"], ref_scores, atol=1e-5, rtol=1e-4)
    assert jnp.allclose(out["mean_score"], ref_mean, atol=1e-5, rtol=1e-4)

    print("KERNEL_OK")
</pallas_src>

<mosaic_0001>
module attributes {stable_mosaic.version = 11 : i64} {
  func.func @_principle_evaluator_kernel(%arg0: i32, %arg1: i32, %arg2: memref<2x16x32xf32, #tpu.memory_space<vmem>>, %arg3: memref<2x16x1xf32, #tpu.memory_space<vmem>>, %arg4: memref<32x32xf32, #tpu.memory_space<vmem>>, %arg5: memref<1x32xf32, #tpu.memory_space<vmem>>, %arg6: memref<32x32xf32, #tpu.memory_space<vmem>>, %arg7: memref<1x32xf32, #tpu.memory_space<vmem>>, %arg8: memref<32x128xf32, #tpu.memory_space<vmem>>, %arg9: memref<1x128xf32, #tpu.memory_space<vmem>>, %arg10: memref<2x128xf32, #tpu.memory_space<vmem>>, %arg11: memref<2x1xf32, #tpu.memory_space<vmem>>, %arg12: memref<2x32xf32, #tpu.memory_space<vmem>>, %arg13: memref<2x1xf32, #tpu.memory_space<vmem>>) attributes {dimension_semantics = [#tpu.dimension_semantics<parallel>, #tpu.dimension_semantics<arbitrary>], iteration_bounds = array<i64: 1, 4>, scalar_prefetch = 0 : i64, scratch_operands = 2 : i64, tpu.core_type = #tpu.core_type<tc>, window_params = [{transform_indices = @transform_0, window_bounds = array<i64: 2, 16, 32>}, {transform_indices = @transform_1, window_bounds = array<i64: 2, 16, 1>}, {pipeline_mode = #tpu.pipeline_mode<synchronous>, transform_indices = @transform_2, window_bounds = array<i64: 32, 32>}, {pipeline_mode = #tpu.pipeline_mode<synchronous>, transform_indices = @transform_3, window_bounds = array<i64: 1, 32>}, {pipeline_mode = #tpu.pipeline_mode<synchronous>, transform_indices = @transform_4, window_bounds = array<i64: 32, 32>}, {pipeline_mode = #tpu.pipeline_mode<synchronous>, transform_indices = @transform_5, window_bounds = array<i64: 1, 32>}, {pipeline_mode = #tpu.pipeline_mode<synchronous>, transform_indices = @transform_6, window_bounds = array<i64: 32, 128>}, {pipeline_mode = #tpu.pipeline_mode<synchronous>, transform_indices = @transform_7, window_bounds = array<i64: 1, 128>}, {transform_indices = @transform_8, window_bounds = array<i64: 2, 128>}, {transform_indices = @transform_9, window_bounds = array<i64: 2, 1>}]} {
    %c0_i32 = arith.constant 0 : i32
    %0 = arith.cmpi eq, %arg1, %c0_i32 : i32
    %1 = arith.extui %0 : i1 to i32
    %c0_i32_0 = arith.constant 0 : i32
    %2 = arith.cmpi ne, %1, %c0_i32_0 : i32
    scf.if %2 {
      %cst_16 = arith.constant 0.000000e+00 : f32
      %18 = vector.broadcast %cst_16 : f32 to vector<2x32xf32>
      %c0_17 = arith.constant 0 : index
      %c0_18 = arith.constant 0 : index
      %19 = vector.load %arg12[%c0_17, %c0_18] : memref<2x32xf32, #tpu.memory_space<vmem>>, vector<2x32xf32>
      tpu.vector_store %arg12[%c0_17, %c0_18], %18 {strides = array<i32>} : memref<2x32xf32, #tpu.memory_space<vmem>>, vector<2x32xf32>,
      %cst_19 = arith.constant 0.000000e+00 : f32
      %20 = vector.broadcast %cst_19 : f32 to vector<2x1xf32>
      %c0_20 = arith.constant 0 : index
      %c0_21 = arith.constant 0 : index
      %21 = vector.load %arg13[%c0_20, %c0_21] : memref<2x1xf32, #tpu.memory_space<vmem>>, vector<2x1xf32>
      tpu.vector_store %arg13[%c0_20, %c0_21], %20 {strides = array<i32>} : memref<2x1xf32, #tpu.memory_space<vmem>>, vector<2x1xf32>,
    } else {
    }
    %c0 = arith.constant 0 : index
    %c0_1 = arith.constant 0 : index
    %c0_2 = arith.constant 0 : index
    %3 = vector.load %arg2[%c0, %c0_1, %c0_2] : memref<2x16x32xf32, #tpu.memory_space<vmem>>, vector<2x16x32xf32>
    %c0_3 = arith.constant 0 : index
    %c0_4 = arith.constant 0 : index
    %c0_5 = arith.constant 0 : index
    %4 = vector.load %arg3[%c0_3, %c0_4, %c0_5] : memref<2x16x1xf32, #tpu.memory_space<vmem>>, vector<2x16x1xf32>
    %5 = vector.broadcast %4 : vector<2x16x1xf32> to vector<2x16x32xf32>
    %6 = arith.mulf %3, %5 : vector<2x16x32xf32>
    %c0_6 = arith.constant 0 : index
    %c0_7 = arith.constant 0 : index
    %7 = vector.load %arg12[%c0_6, %c0_7] : memref<2x32xf32, #tpu.memory_space<vmem>>, vector<2x32xf32>
    %cst = arith.constant dense<0.000000e+00> : vector<2x32xf32>
    %8 = vector.multi_reduction <add>, %6, %cst [1] : vector<2x16x32xf32> to vector<2x32xf32>
    %9 = arith.addf %7, %8 : vector<2x32xf32>
    %c0_8 = arith.constant 0 : index
    %c0_9 = arith.constant 0 : index
    %10 = vector.load %arg12[%c0_8, %c0_9] : memref<2x32xf32, #tpu.memory_space<vmem>>, vector<2x32xf32>
    tpu.vector_store %arg12[%c0_8, %c0_9], %9 {strides = array<i32>} : memref<2x32xf32, #tpu.memory_space<vmem>>, vector<2x32xf32>,
    %c0_10 = arith.constant 0 : index
    %c0_11 = arith.constant 0 : index
    %11 = vector.load %arg13[%c0_10, %c0_11] : memref<2x1xf32, #tpu.memory_space<vmem>>, vector<2x1xf32>
    %cst_12 = arith.constant dense<0.000000e+00> : vector<2x1xf32>
    %12 = vector.multi_reduction <add>, %4, %cst_12 [1] : vector<2x16x1xf32> to vector<2x1xf32>
    %13 = arith.addf %11, %12 : vector<2x1xf32>
    %c0_13 = arith.constant 0 : index
    %c0_14 = arith.constant 0 : index
    %14 = vector.load %arg13[%c0_13, %c0_14] : memref<2x1xf32, #tpu.memory_space<vmem>>, vector<2x1xf32>
    tpu.vector_store %arg13[%c0_13, %c0_14], %13 {strides = array<i32>} : memref<2x1xf32, #tpu.memory_space<vmem>>, vector<2x1xf32>,
    %c3_i32 = arith.constant 3 : i32
    %15 = arith.cmpi eq, %arg1, %c3_i32 : i32
    %16 = arith.extui %15 : i1 to i32
    %c0_i32_15 = arith.constant 0 : i32
    %17 = arith.cmpi ne, %16, %c0_i32_15 : i32
    scf.if %17 {
      %c0_16 = arith.constant 0 : index
      %c0_17 = arith.constant 0 : index
      %18 = vector.load %arg12[%c0_16, %c0_17] : memref<2x32xf32, #tpu.memory_space<vmem>>, vector<2x32xf32>
      %c0_18 = arith.constant 0 : index
      %c0_19 = arith.constant 0 : index
      %19 = vector.load %arg13[%c0_18, %c0_19] : memref<2x1xf32, #tpu.memory_space<vmem>>, vector<2x1xf32>
      %20 = vector.broadcast %19 : vector<2x1xf32> to vector<2x32xf32>
      %21 = arith.divf %18, %20 : vector<2x32xf32>
      %c0_20 = arith.constant 0 : index
      %c0_21 = arith.constant 0 : index
      %22 = vector.load %arg4[%c0_20, %c0_21] : memref<32x32xf32, #tpu.memory_space<vmem>>, vector<32x32xf32>
      %cst_22 = arith.constant dense<0.000000e+00> : vector<2x32xf32>
      %23 = tpu.matmul %21, %22, %cst_22 {dimension_numbers = #tpu.dot_dimension_numbers<[1], [0], [0], [1], [0, 0, 1, 1], [], []>} : vector<2x32xf32>, vector<32x32xf32>, vector<2x32xf32> -> vector<2x32xf32>
      %c0_23 = arith.constant 0 : index
      %c0_24 = arith.constant 0 : index
      %24 = vector.load %arg5[%c0_23, %c0_24] : memref<1x32xf32, #tpu.memory_space<vmem>>, vector<1x32xf32>
      %25 = vector.broadcast %24 : vector<1x32xf32> to vector<2x32xf32>
      %26 = arith.addf %23, %25 : vector<2x32xf32>
      %cst_25 = arith.constant 5.000000e-01 : f32
      %27 = vector.broadcast %cst_25 : f32 to vector<2x32xf32>
      %28 = arith.mulf %27, %26 : vector<2x32xf32>
      %cst_26 = arith.constant 0.707106769 : f32
      %29 = vector.broadcast %cst_26 : f32 to vector<2x32xf32>
      %30 = arith.mulf %26, %29 : vector<2x32xf32>
      %31 = math.erf %30 : vector<2x32xf32>
      %cst_27 = arith.constant 1.000000e+00 : f32
      %32 = vector.broadcast %cst_27 : f32 to vector<2x32xf32>
      %33 = arith.addf %32, %31 : vector<2x32xf32>
      %34 = arith.mulf %28, %33 : vector<2x32xf32>
      %c0_28 = arith.constant 0 : index
      %c0_29 = arith.constant 0 : index
      %35 = vector.load %arg6[%c0_28, %c0_29] : memref<32x32xf32, #tpu.memory_space<vmem>>, vector<32x32xf32>
      %cst_30 = arith.constant dense<0.000000e+00> : vector<2x32xf32>
      %36 = tpu.matmul %34, %35, %cst_30 {dimension_numbers = #tpu.dot_dimension_numbers<[1], [0], [0], [1], [0, 0, 1, 1], [], []>} : vector<2x32xf32>, vector<32x32xf32>, vector<2x32xf32> -> vector<2x32xf32>
      %c0_31 = arith.constant 0 : index
      %c0_32 = arith.constant 0 : index
      %37 = vector.load %arg7[%c0_31, %c0_32] : memref<1x32xf32, #tpu.memory_space<vmem>>, vector<1x32xf32>
      %38 = vector.broadcast %37 : vector<1x32xf32> to vector<2x32xf32>
      %39 = arith.addf %36, %38 : vector<2x32xf32>
      %c0_33 = arith.constant 0 : index
      %c0_34 = arith.constant 0 : index
      %40 = vector.load %arg8[%c0_33, %c0_34] : memref<32x128xf32, #tpu.memory_space<vmem>>, vector<32x128xf32>
      %cst_35 = arith.constant dense<0.000000e+00> : vector<2x128xf32>
      %41 = tpu.matmul %39, %40, %cst_35 {dimension_numbers = #tpu.dot_dimension_numbers<[1], [0], [0], [1], [0, 0, 1, 1], [], []>} : vector<2x32xf32>, vector<32x128xf32>, vector<2x128xf32> -> vector<2x128xf32>
      %c0_36 = arith.constant 0 : index
      %c0_37 = arith.constant 0 : index
      %42 = vector.load %arg9[%c0_36, %c0_37] : memref<1x128xf32, #tpu.memory_space<vmem>>, vector<1x128xf32>
      %43 = vector.broadcast %42 : vector<1x128xf32> to vector<2x128xf32>
      %44 = arith.addf %41, %43 : vector<2x128xf32>
      %45 = arith.negf %44 : vector<2x128xf32>
      %46 = math.exp %45 : vector<2x128xf32>
      %cst_38 = arith.constant 1.000000e+00 : f32
      %47 = vector.broadcast %cst_38 : f32 to vector<2x128xf32>
      %48 = arith.addf %47, %46 : vector<2x128xf32>
      %49 = arith.divf %47, %48 : vector<2x128xf32>
      %c0_39 = arith.constant 0 : index
      %c0_40 = arith.constant 0 : index
      %50 = vector.load %arg10[%c0_39, %c0_40] : memref<2x128xf32, #tpu.memory_space<vmem>>, vector<2x128xf32>
      tpu.vector_store %arg10[%c0_39, %c0_40], %49 {strides = array<i32>} : memref<2x128xf32, #tpu.memory_space<vmem>>, vector<2x128xf32>,
      %51 = tpu.iota {dimensions = array<i32: 1>} : vector<2x128xi32>
      %c12_i32 = arith.constant 12 : i32
      %52 = vector.broadcast %c12_i32 : i32 to vector<2x128xi32>
      %53 = arith.cmpi slt, %51, %52 : vector<2x128xi32>
      %54 = arith.extui %53 : vector<2x128xi1> to vector<2x128xi32>
      %55 = arith.sitofp %54 : vector<2x128xi32> to vector<2x128xf32>
      %56 = arith.mulf %49, %55 : vector<2x128xf32>
      %cst_41 = arith.constant dense<0.000000e+00> : vector<2xf32>
      %57 = vector.multi_reduction <add>, %56, %cst_41 [1] : vector<2x128xf32> to vector<2xf32>
      %58 = vector.shape_cast %57 : vector<2xf32> to vector<2x1xf32>
      %cst_42 = arith.constant 1.200000e+01 : f32
      %59 = vector.broadcast %cst_42 : f32 to vector<2x1xf32>
      %60 = arith.divf %58, %59 : vector<2x1xf32>
      %c0_43 = arith.constant 0 : index
      %c0_44 = arith.constant 0 : index
      %61 = vector.load %arg11[%c0_43, %c0_44] : memref<2x1xf32, #tpu.memory_space<vmem>>, vector<2x1xf32>
      tpu.vector_store %arg11[%c0_43, %c0_44], %60 {strides = array<i32>} : memref<2x1xf32, #tpu.memory_space<vmem>>, vector<2x1xf32>,
    } else {
    }
    return
  }
  func.func @transform_0(%arg0: i32, %arg1: i32) -> (i32, i32, i32) {
    %c0_i32 = arith.constant 0 : i32
    %c0_i32_0 = arith.constant 0 : i32
    return %arg0, %arg1, %c0_i32 : i32, i32, i32
  }
  func.func @transform_1(%arg0: i32, %arg1: i32) -> (i32, i32, i32) {
    %c0_i32 = arith.constant 0 : i32
    %c0_i32_0 = arith.constant 0 : i32
    return %arg0, %arg1, %c0_i32 : i32, i32, i32
  }
  func.func @transform_2(%arg0: i32, %arg1: i32) -> (i32, i32) {
    %c0_i32 = arith.constant 0 : i32
    %c0_i32_0 = arith.constant 0 : i32
    %c0_i32_1 = arith.constant 0 : i32
    return %c0_i32, %c0_i32_0 : i32, i32
  }
  func.func @transform_3(%arg0: i32, %arg1: i32) -> (i32, i32) {
    %c0_i32 = arith.constant 0 : i32
    %c0_i32_0 = arith.constant 0 : i32
    %c0_i32_1 = arith.constant 0 : i32
    return %c0_i32, %c0_i32_0 : i32, i32
  }
  func.func @transform_4(%arg0: i32, %arg1: i32) -> (i32, i32) {
    %c0_i32 = arith.constant 0 : i32
    %c0_i32_0 = arith.constant 0 : i32
    %c0_i32_1 = arith.constant 0 : i32
    return %c0_i32, %c0_i32_0 : i32, i32
  }
  func.func @transform_5(%arg0: i32, %arg1: i32) -> (i32, i32) {
    %c0_i32 = arith.constant 0 : i32
    %c0_i32_0 = arith.constant 0 : i32
    %c0_i32_1 = arith.constant 0 : i32
    return %c0_i32, %c0_i32_0 : i32, i32
  }
  func.func @transform_6(%arg0: i32, %arg1: i32) -> (i32, i32) {
    %c0_i32 = arith.constant 0 : i32
    %c0_i32_0 = arith.constant 0 : i32
    %c0_i32_1 = arith.constant 0 : i32
    return %c0_i32, %c0_i32_0 : i32, i32
  }
  func.func @transform_7(%arg0: i32, %arg1: i32) -> (i32, i32) {
    %c0_i32 = arith.constant 0 : i32
    %c0_i32_0 = arith.constant 0 : i32
    %c0_i32_1 = arith.constant 0 : i32
    return %c0_i32, %c0_i32_0 : i32, i32
  }
  func.func @transform_8(%arg0: i32, %arg1: i32) -> (i32, i32) {
    %c0_i32 = arith.constant 0 : i32
    %c0_i32_0 = arith.constant 0 : i32
    return %arg0, %c0_i32 : i32, i32
  }
  func.func @transform_9(%arg0: i32, %arg1: i32) -> (i32, i32) {
    %c0_i32 = arith.constant 0 : i32
    %c0_i32_0 = arith.constant 0 : i32
    return %arg0, %c0_i32 : i32, i32
  }
}

</mosaic_0001>

<llo_original>
// kernel: tpu_custom_call.1
$region0: #{tpu_custom_call.1}
  #allocation0 [shape = 'u32[]', space=smem, size = 0x4, offset = 0x4, fixed_abs, tag = 'smem constant byte address 0x4 - core index']
  #allocation1 [shape = 'u32[144,128]{1,0:T(1,128)}', space=vmem, size = 0x12000, scoped, tag = 'internal scratch']
  #allocation2 [shape = 'f32[2,32]{1,0:T(2,128)}', space=vmem, size = 0x400, scoped, tag = 'scratch operand']
  #allocation3 [shape = 'f32[2,1]{1,0:T(2,128)}', space=vmem, size = 0x400, scoped, tag = 'scratch operand']
  %s0 = inlined_call_operand.vmem [shape: f32[2,64,32], index: 0, kind: input, shape index: {}]
  %s1 = inlined_call_operand.vmem [shape: f32[2,64,1], index: 1, kind: input, shape index: {}]
  %s2 = inlined_call_operand.vmem [shape: f32[32,32], index: 2, kind: input, shape index: {}]
  %s3 = inlined_call_operand.vmem [shape: f32[1,32], index: 3, kind: input, shape index: {}]
  %s4 = inlined_call_operand.vmem [shape: f32[32,32], index: 4, kind: input, shape index: {}]
  %s5 = inlined_call_operand.vmem [shape: f32[1,32], index: 5, kind: input, shape index: {}]
  %s6 = inlined_call_operand.vmem [shape: f32[32,128], index: 6, kind: input, shape index: {}]
  %s7 = inlined_call_operand.vmem [shape: f32[1,128], index: 7, kind: input, shape index: {}]
  %s8 = inlined_call_operand.hbm [shape: f32[2,128], index: 8, kind: output, shape index: {0}]
  %s9 = inlined_call_operand.vmem [shape: f32[2,1], index: 9, kind: output, shape index: {1}]
  %10 = xla_tuple %s8, %s9
  %s11 = sld [smem:[#allocation0]]
  $region157: #{tpu_custom_call.1} parent=0
    _
  %s13 = ssub.s32 1, %s11
  %s14 = scalar_select 0, %s13, %s11
  $region1: #{tpu_custom_call.1} parent=0
    #allocation4 [shape = 'u8[32768]{0}', space=vmem, size = 0x8000, scoped, tag = 'input window, operand 0']
    #allocation5 [shape = 'u8[32768]{0}', space=vmem, size = 0x8000, scoped, tag = 'input window, operand 1']
    #allocation6 [shape = 'u8[1024]{0}', space=vmem, size = 0x400, scoped, tag = 'output window, operand 0, single buffered']
    #allocation7 [shape = 's32[2]{0}', space=sflag, size = 0x8, scoped, tag = 'scoped memory for tpu_custom_call.1']
    %15 = vsyncpa [#allocation7], 0
    loop: start=0, step=1, limit=6
    $region2: #{tpu_custom_call.1} parent=1 // loop_pre_header
      _
    $region3: #{tpu_custom_call.1} parent=1 // loop_header
      %s17 = sphi 0, %s21
      %p18 = scmp.ge.s32.totalorder %s17, 6
      %s24 = sphi 0, %s36
      %s25 = sphi 0, %s32
      %s26 = sphi 0, %s24
      %s27 = sphi 0, %s25
      %s28 = sphi 0, %s26
      %s29 = sphi 0, %s27
      %s41 = sphi 0, %s43
      %s44 = sphi 0, %s41
      %s45 = sphi 0, %s44
      %s61 = sphi 0, %s45
      %s69 = sphi 0, %s71
      %s72 = sphi 0, %s69
      %s73 = sphi 0, %s72
      %s89 = sphi 0, %s73
      %s93 = sphi 0, %s93
      %s95 = sphi 0, %s93
      %s96 = sphi 0, %s95
      %s110 = sphi 0, %s96
      %s114 = sphi 0, %s114
      %s116 = sphi 0, %s114
      %s117 = sphi 0, %s116
      %s131 = sphi 0, %s117
      %s135 = sphi 0, %s135
      %s137 = sphi 0, %s135
      %s138 = sphi 0, %s137
      %s152 = sphi 0, %s138
      %s156 = sphi 0, %s156
      %s158 = sphi 0, %s156
      %s159 = sphi 0, %s158
      %s173 = sphi 0, %s159
      %s177 = sphi 0, %s177
      %s179 = sphi 0, %s177
      %s180 = sphi 0, %s179
      %s194 = sphi 0, %s180
      %s198 = sphi 0, %s198
      %s200 = sphi 0, %s198
      %s201 = sphi 0, %s200
      %s215 = sphi 0, %s201
      %s221 = sphi 0, %s223
      %s224 = sphi 0, %s221
      %s225 = sphi 0, %s224
      %s241 = sphi 0, %s225
      %s247 = sphi 0, %s249
      %s250 = sphi 0, %s247
      %s251 = sphi 0, %s250
      %s267 = sphi 0, %s251
    $region4: #{tpu_custom_call.1} parent=1 // loop_header_branch
      %20 = sbr.rel (%p18) target = $region8
    $region5: #{tpu_custom_call.1} parent=1 // loop_body
      %s22 = ssub.s32 %s17, 1
      %s23 = ssub.s32 %s17, 2
      %s30 = sadd.s32 1, %s25
      %p31 = scmp.ge.s32.totalorder %s30, 4
      %s32 = scalar_select %p31, 0, %s30
      %s33 = sadd.s32 1, %s24
      %s34 = scalar_select %p31, %s33, %s24
      %p35 = scmp.ge.s32.totalorder %s34, 1
      %s36 = scalar_select %p35, 0, %s34
      %s37 = ssub.s32 %s24, %s36
      %s38 = ssub.s32 %s25, %s32
      %s39 = sor.u32 %s37, %s38
      %p40 = scmp.eq.s32.totalorder %s39, 0
      %s42 = sadd.s32 %s41, 1
      %s43 = scalar_select %p40, %s41, %s42
      %p46 = pneg %p40
      %p47 = scmp.eq.s32.totalorder %s17, 3
      %p48 = por %p46, %p47
      %p49 = scmp.ne.s32.totalorder %s41, %s44
      %p50 = scmp.eq.s32.totalorder %s17, 0
      %p51 = por %p49, %p50
      %p52 = scmp.ne.s32.totalorder %s41, %s44
      %p53 = scmp.eq.s32.totalorder %s22, 3
      %p54 = por %p52, %p53
      %p55 = scmp.ne.s32.totalorder %s44, %s45
      %p56 = scmp.eq.s32.totalorder %s22, 0
      %p57 = por %p55, %p56
      %p58 = scmp.ne.s32.totalorder %s44, %s45
      %p59 = scmp.eq.s32.totalorder %s23, 3
      %p60 = por %p58, %p59
      %p62 = scmp.ne.s32.totalorder %s45, %s61
      %p63 = scmp.eq.s32.totalorder %s23, 0
      %p64 = por %p62, %p63
      %s65 = ssub.s32 %s24, %s36
      %s66 = ssub.s32 %s25, %s32
      %s67 = sor.u32 %s65, %s66
      %p68 = scmp.eq.s32.totalorder %s67, 0
      %s70 = sadd.s32 %s69, 1
      %s71 = scalar_select %p68, %s69, %s70
      %p74 = pneg %p68
      %p75 = scmp.eq.s32.totalorder %s17, 3
      %p76 = por %p74, %p75
      %p77 = scmp.ne.s32.totalorder %s69, %s72
      %p78 = scmp.eq.s32.totalorder %s17, 0
      %p79 = por %p77, %p78
      %p80 = scmp.ne.s32.totalorder %s69, %s72
      %p81 = scmp.eq.s32.totalorder %s22, 3
      %p82 = por %p80, %p81
      %p83 = scmp.ne.s32.totalorder %s72, %s73
      %p84 = scmp.eq.s32.totalorder %s22, 0
      %p85 = por %p83, %p84
      %p86 = scmp.ne.s32.totalorder %s72, %s73
      %p87 = scmp.eq.s32.totalorder %s23, 3
      %p88 = por %p86, %p87
      %p90 = scmp.ne.s32.totalorder %s73, %s89
      %p91 = scmp.eq.s32.totalorder %s23, 0
      %p92 = por %p90, %p91
      %s94 = sadd.s32 %s93, 1
      %p97 = scmp.eq.s32.totalorder %s17, 3
      %p98 = scmp.ne.s32.totalorder %s93, %s95
      %p99 = scmp.eq.s32.totalorder %s17, 0
      %p100 = por %p98, %p99
      %p101 = scmp.ne.s32.totalorder %s93, %s95
      %p102 = scmp.eq.s32.totalorder %s22, 3
      %p103 = por %p101, %p102
      %p104 = scmp.ne.s32.totalorder %s95, %s96
      %p105 = scmp.eq.s32.totalorder %s22, 0
      %p106 = por %p104, %p105
      %p107 = scmp.ne.s32.totalorder %s95, %s96
      %p108 = scmp.eq.s32.totalorder %s23, 3
      %p109 = por %p107, %p108
      %p111 = scmp.ne.s32.totalorder %s96, %s110
      %p112 = scmp.eq.s32.totalorder %s23, 0
      %p113 = por %p111, %p112
      %s115 = sadd.s32 %s114, 1
      %p118 = scmp.eq.s32.totalorder %s17, 3
      %p119 = scmp.ne.s32.totalorder %s114, %s116
      %p120 = scmp.eq.s32.totalorder %s17, 0
      %p121 = por %p119, %p120
      %p122 = scmp.ne.s32.totalorder %s114, %s116
      %p123 = scmp.eq.s32.totalorder %s22, 3
      %p124 = por %p122, %p123
      %p125 = scmp.ne.s32.totalorder %s116, %s117
      %p126 = scmp.eq.s32.totalorder %s22, 0
      %p127 = por %p125, %p126
      %p128 = scmp.ne.s32.totalorder %s116, %s117
      %p129 = scmp.eq.s32.totalorder %s23, 3
      %p130 = por %p128, %p129
      %p132 = scmp.ne.s32.totalorder %s117, %s131
      %p133 = scmp.eq.s32.totalorder %s23, 0
      %p134 = por %p132, %p133
      %s136 = sadd.s32 %s135, 1
      %p139 = scmp.eq.s32.totalorder %s17, 3
      %p140 = scmp.ne.s32.totalorder %s135, %s137
      %p141 = scmp.eq.s32.totalorder %s17, 0
      %p142 = por %p140, %p141
      %p143 = scmp.ne.s32.totalorder %s135, %s137
      %p144 = scmp.eq.s32.totalorder %s22, 3
      %p145 = por %p143, %p144
      %p146 = scmp.ne.s32.totalorder %s137, %s138
      %p147 = scmp.eq.s32.totalorder %s22, 0
      %p148 = por %p146, %p147
      %p149 = scmp.ne.s32.totalorder %s137, %s138
      %p150 = scmp.eq.s32.totalorder %s23, 3
      %p151 = por %p149, %p150
      %p153 = scmp.ne.s32.totalorder %s138, %s152
      %p154 = scmp.eq.s32.totalorder %s23, 0
      %p155 = por %p153, %p154
      %s157 = sadd.s32 %s156, 1
      %p160 = scmp.eq.s32.totalorder %s17, 3
      %p161 = scmp.ne.s32.totalorder %s156, %s158
      %p162 = scmp.eq.s32.totalorder %s17, 0
      %p163 = por %p161, %p162
      %p164 = scmp.ne.s32.totalorder %s156, %s158
      %p165 = scmp.eq.s32.totalorder %s22, 3
      %p166 = por %p164, %p165
      %p167 = scmp.ne.s32.totalorder %s158, %s159
      %p168 = scmp.eq.s32.totalorder %s22, 0
      %p169 = por %p167, %p168
      %p170 = scmp.ne.s32.totalorder %s158, %s159
      %p171 = scmp.eq.s32.totalorder %s23, 3
      %p172 = por %p170, %p171
      %p174 = scmp.ne.s32.totalorder %s159, %s173
      %p175 = scmp.eq.s32.totalorder %s23, 0
      %p176 = por %p174, %p175
      %s178 = sadd.s32 %s177, 1
      %p181 = scmp.eq.s32.totalorder %s17, 3
      %p182 = scmp.ne.s32.totalorder %s177, %s179
      %p183 = scmp.eq.s32.totalorder %s17, 0
      %p184 = por %p182, %p183
      %p185 = scmp.ne.s32.totalorder %s177, %s179
      %p186 = scmp.eq.s32.totalorder %s22, 3
      %p187 = por %p185, %p186
      %p188 = scmp.ne.s32.totalorder %s179, %s180
      %p189 = scmp.eq.s32.totalorder %s22, 0
      %p190 = por %p188, %p189
      %p191 = scmp.ne.s32.totalorder %s179, %s180
      %p192 = scmp.eq.s32.totalorder %s23, 3
      %p193 = por %p191, %p192
      %p195 = scmp.ne.s32.totalorder %s180, %s194
      %p196 = scmp.eq.s32.totalorder %s23, 0
      %p197 = por %p195, %p196
      %s199 = sadd.s32 %s198, 1
      %p202 = scmp.eq.s32.totalorder %s17, 3
      %p203 = scmp.ne.s32.totalorder %s198, %s200
      %p204 = scmp.eq.s32.totalorder %s17, 0
      %p205 = por %p203, %p204
      %p206 = scmp.ne.s32.totalorder %s198, %s200
      %p207 = scmp.eq.s32.totalorder %s22, 3
      %p208 = por %p206, %p207
      %p209 = scmp.ne.s32.totalorder %s200, %s201
      %p210 = scmp.eq.s32.totalorder %s22, 0
      %p211 = por %p209, %p210
      %p212 = scmp.ne.s32.totalorder %s200, %s201
      %p213 = scmp.eq.s32.totalorder %s23, 3
      %p214 = por %p212, %p213
      %p216 = scmp.ne.s32.totalorder %s201, %s215
      %p217 = scmp.eq.s32.totalorder %s23, 0
      %p218 = por %p216, %p217
      %s219 = ssub.s32 %s24, %s36
      %p220 = scmp.eq.s32.totalorder %s219, 0
      %s222 = sadd.s32 %s221, 1
      %s223 = scalar_select %p220, %s221, %s222
      %p226 = pneg %p220
      %p227 = scmp.eq.s32.totalorder %s17, 3
      %p228 = por %p226, %p227
      %p229 = scmp.ne.s32.totalorder %s221, %s224
      %p230 = scmp.eq.s32.totalorder %s17, 0
      %p231 = por %p229, %p230
      %p232 = scmp.ne.s32.totalorder %s221, %s224
      %p233 = scmp.eq.s32.totalorder %s22, 3
      %p234 = por %p232, %p233
      %p235 = scmp.ne.s32.totalorder %s224, %s225
      %p236 = scmp.eq.s32.totalorder %s22, 0
      %p237 = por %p235, %p236
      %p238 = scmp.ne.s32.totalorder %s224, %s225
      %p239 = scmp.eq.s32.totalorder %s23, 3
      %p240 = por %p238, %p239
      %p242 = scmp.ne.s32.totalorder %s225, %s241
      %p243 = scmp.eq.s32.totalorder %s23, 0
      %p244 = por %p242, %p243
      %s245 = ssub.s32 %s24, %s36
      %p246 = scmp.eq.s32.totalorder %s245, 0
      %s248 = sadd.s32 %s247, 1
      %s249 = scalar_select %p246, %s247, %s248
      %p252 = pneg %p246
      %p253 = scmp.eq.s32.totalorder %s17, 3
      %p254 = por %p252, %p253
      %p255 = scmp.ne.s32.totalorder %s247, %s250
      %p256 = scmp.eq.s32.totalorder %s17, 0
      %p257 = por %p255, %p256
      %p258 = scmp.ne.s32.totalorder %s247, %s250
      %p259 = scmp.eq.s32.totalorder %s22, 3
      %p260 = por %p258, %p259
      %p261 = scmp.ne.s32.totalorder %s250, %s251
      %p262 = scmp.eq.s32.totalorder %s22, 0
      %p263 = por %p261, %p262
      %p264 = scmp.ne.s32.totalorder %s250, %s251
      %p265 = scmp.eq.s32.totalorder %s23, 3
      %p266 = por %p264, %p265
      %p268 = scmp.ne.s32.totalorder %s251, %s267
      %p269 = scmp.eq.s32.totalorder %s23, 0
      %p270 = por %p268, %p269
      %p271 = scmp.le.s32.totalorder 1, %s17
      %p272 = scmp.lt.s32.totalorder %s17, 5
      %p273 = pnand %p271, %p272
      %p274 = pneg %p273
      // Predicated region
      $region9: #{tpu_custom_call.1} parent=5 // pred_check
        _
      $region10: #{tpu_custom_call.1} parent=5 // pred_check_branch
        %276 = sbr.rel (%p273) target = $region12
      $region11: #{tpu_custom_call.1} parent=5 // pred_region
        %s277 = ssub.s32 %s17, 1
        // Predicated region
        $region13: #{tpu_custom_call.1} parent=11 // pred_check
          %p278 = pneg %p106
        $region14: #{tpu_custom_call.1} parent=11 // pred_check_branch
          %280 = sbr.rel (%p278) target = $region16
        $region15: #{tpu_custom_call.1} parent=11 // pred_region
          _
        $region16: #{tpu_custom_call.1} parent=11 // pred_fallthru
          _
        // Predicated region
        $region17: #{tpu_custom_call.1} parent=11 // pred_check
          %p281 = pneg %p127
        $region18: #{tpu_custom_call.1} parent=11 // pred_check_branch
          %283 = sbr.rel (%p281) target = $region20
        $region19: #{tpu_custom_call.1} parent=11 // pred_region
          _
        $region20: #{tpu_custom_call.1} parent=11 // pred_fallthru
          _
        // Predicated region
        $region21: #{tpu_custom_call.1} parent=11 // pred_check
          %p284 = pneg %p148
        $region22: #{tpu_custom_call.1} parent=11 // pred_check_branch
          %286 = sbr.rel (%p284) target = $region24
        $region23: #{tpu_custom_call.1} parent=11 // pred_region
          _
        $region24: #{tpu_custom_call.1} parent=11 // pred_fallthru
          _
        // Predicated region
        $region25: #{tpu_custom_call.1} parent=11 // pred_check
          %p287 = pneg %p169
        $region26: #{tpu_custom_call.1} parent=11 // pred_check_branch
          %289 = sbr.rel (%p287) target = $region28
        $region27: #{tpu_custom_call.1} parent=11 // pred_region
          _
        $region28: #{tpu_custom_call.1} parent=11 // pred_fallthru
          _
        // Predicated region
        $region29: #{tpu_custom_call.1} parent=11 // pred_check
          %p290 = pneg %p190
        $region30: #{tpu_custom_call.1} parent=11 // pred_check_branch
          %292 = sbr.rel (%p290) target = $region32
        $region31: #{tpu_custom_call.1} parent=11 // pred_region
          _
        $region32: #{tpu_custom_call.1} parent=11 // pred_fallthru
          _
        // Predicated region
        $region33: #{tpu_custom_call.1} parent=11 // pred_check
          %p293 = pneg %p211
        $region34: #{tpu_custom_call.1} parent=11 // pred_check_branch
          %295 = sbr.rel (%p293) target = $region36
        $region35: #{tpu_custom_call.1} parent=11 // pred_region
          _
        $region36: #{tpu_custom_call.1} parent=11 // pred_fallthru
          _
      $region12: #{tpu_custom_call.1} parent=5 // pred_fallthru
        _
      %p296 = scmp.lt.s32.totalorder %s17, 4
      // Predicated region
      $region37: #{tpu_custom_call.1} parent=5 // pred_check
        %p297 = pneg %p296
      $region38: #{tpu_custom_call.1} parent=5 // pred_check_branch
        %299 = sbr.rel (%p297) target = $region40
      $region39: #{tpu_custom_call.1} parent=5 // pred_region
        // Predicated region
        $region41: #{tpu_custom_call.1} parent=39 // pred_check
          %p300 = pneg %p51
        $region42: #{tpu_custom_call.1} parent=39 // pred_check_branch
          %302 = sbr.rel (%p300) target = $region44
        $region43: #{tpu_custom_call.1} parent=39 // pred_region
          %s303 = sand.u32 %s41, 1
          %s304 = sand.u32 %s41, 1
          %s305 = smul.addr %s304, 32
          %s306 = scalar_lea.vmem [#allocation4], %s305
          %s307 = smul.u32 2, %s24
          %s308 = smul.u32 2, %s25
          %s309 = smul.addr %s307, 8
          %s310 = sadd.s32 %s308, %s309
          %s311 = smul.addr %s310, 8
          %s312 = scalar_lea.vmem %s0, %s311
          // Predicated region
          $region45: #{tpu_custom_call.1} parent=43 // pred_check
            _
          $region46: #{tpu_custom_call.1} parent=43 // pred_check_branch
            %314 = sbr.rel (0) target = $region48
          $region47: #{tpu_custom_call.1} parent=43 // pred_region
            // Predicated region
            $region49: #{tpu_custom_call.1} parent=47 // pred_check
              _
            $region50: #{tpu_custom_call.1} parent=47 // pred_check_branch
              %316 = sbr.rel (0) target = $region52
            $region51: #{tpu_custom_call.1} parent=47 // pred_region
              // Predicated region
              $region64: #{tpu_custom_call.1} parent=51 // pred_check
                _
              $region65: #{tpu_custom_call.1} parent=51 // pred_check_branch
                %337 = sbr.rel (0) target = $region67
              $region66: #{tpu_custom_call.1} parent=51 // pred_region
                loop: start=0, step=1, limit=1
                $region68: #{tpu_custom_call.1} parent=66 // loop_pre_header
                  _
                $region69: #{tpu_custom_call.1} parent=66 // loop_header
                  %s339 = sphi 0, %s343
                  %p340 = scmp.ge.s32.totalorder %s339, 1
                  %s344 = sphi %s312, %s312
                  %s345 = sphi %s306, %s306
                $region70: #{tpu_custom_call.1} parent=66 // loop_header_branch
                  %342 = sbr.rel (%p340) target = $region74
                $region71: #{tpu_custom_call.1} parent=66 // loop_body
                  %v346 = vld [vmem:[%s344] sm:$0xff]
                  %347 = vst [vmem:[%s345] sm:$0xff] %v346
                  %v348 = vld [vmem:[%s344 + $0x8] sm:$0xff]
                  %349 = vst [vmem:[%s345 + $0x8] sm:$0xff] %v348
                  %v350 = vld [vmem:[%s344 + $0x40] sm:$0xff]
                  %351 = vst [vmem:[%s345 + $0x10] sm:$0xff] %v350
                  %v352 = vld [vmem:[%s344 + $0x48] sm:$0xff]
                  %353 = vst [vmem:[%s345 + $0x18] sm:$0xff] %v352
                $region72: #{tpu_custom_call.1} parent=66 // loop_footer
                  %s343 = sadd.s32 1, %s339
                $region73: #{tpu_custom_call.1} parent=66 // loop_footer_branch
                  %338 = sbr.rel target = $region69
                $region74: #{tpu_custom_call.1} parent=66 // loop_exit
                  _
              $region67: #{tpu_custom_call.1} parent=51 // pred_fallthru
                _
              // Predicated region
              $region75: #{tpu_custom_call.1} parent=51 // pred_check
                _
              $region76: #{tpu_custom_call.1} parent=51 // pred_check_branch
                %355 = sbr.rel target = $region78
              $region77: #{tpu_custom_call.1} parent=51 // pred_region
                _
              $region78: #{tpu_custom_call.1} parent=51 // pred_fallthru
                _
            $region52: #{tpu_custom_call.1} parent=47 // pred_fallthru
              _
            // Predicated region
            $region53: #{tpu_custom_call.1} parent=47 // pred_check
              _
            $region54: #{tpu_custom_call.1} parent=47 // pred_check_branch
              %318 = sbr.rel target = $region56
            $region55: #{tpu_custom_call.1} parent=47 // pred_region
              loop: start=0, step=1, limit=1
              $region57: #{tpu_custom_call.1} parent=55 // loop_pre_header
                _
              $region58: #{tpu_custom_call.1} parent=55 // loop_header
                %s321 = sphi 0, %s325
                %p322 = scmp.ge.s32.totalorder %s321, 1
                %s326 = sphi %s312, %s312
                %s327 = sphi %s306, %s306
              $region59: #{tpu_custom_call.1} parent=55 // loop_header_branch
                %324 = sbr.rel (%p322) target = $region63
              $region60: #{tpu_custom_call.1} parent=55 // loop_body
                %v328 = vld [vmem:[%s326] sm:$0xff]
                %329 = vst [vmem:[%s327] sm:$0xff] %v328
                %v330 = vld [vmem:[%s326 + $0x8] sm:$0xff]
                %331 = vst [vmem:[%s327 + $0x8] sm:$0xff] %v330
                %v332 = vld [vmem:[%s326 + $0x40] sm:$0xff]
                %333 = vst [vmem:[%s327 + $0x10] sm:$0xff] %v332
                %v334 = vld [vmem:[%s326 + $0x48] sm:$0xff]
                %335 = vst [vmem:[%s327 + $0x18] sm:$0xff] %v334
              $region61: #{tpu_custom_call.1} parent=55 // loop_footer
                %s325 = sadd.s32 1, %s321
              $region62: #{tpu_custom_call.1} parent=55 // loop_footer_branch
                %320 = sbr.rel target = $region58
              $region63: #{tpu_custom_call.1} parent=55 // loop_exit
                _
            $region56: #{tpu_custom_call.1} parent=47 // pred_fallthru
              _
          $region48: #{tpu_custom_call.1} parent=43 // pred_fallthru
            _
          %356 = vnop
        $region44: #{tpu_custom_call.1} parent=39 // pred_fallthru
          _
        // Predicated region
        $region79: #{tpu_custom_call.1} parent=39 // pred_check
          %p357 = pneg %p79
        $region80: #{tpu_custom_call.1} parent=39 // pred_check_branch
          %359 = sbr.rel (%p357) target = $region82
        $region81: #{tpu_custom_call.1} parent=39 // pred_region
          %s360 = sand.u32 %s69, 1
          %s361 = sand.u32 %s69, 1
          %s362 = smul.addr %s361, 32
          %s363 = scalar_lea.vmem [#allocation5], %s362
          %s364 = smul.u32 2, %s24
          %s365 = smul.u32 2, %s25
          %s366 = smul.addr %s364, 8
          %s367 = sadd.s32 %s365, %s366
          %s368 = smul.addr %s367, 8
          %s369 = scalar_lea.vmem %s1, %s368
          // Predicated region
          $region83: #{tpu_custom_call.1} parent=81 // pred_check
            _
          $region84: #{tpu_custom_call.1} parent=81 // pred_check_branch
            %371 = sbr.rel (0) target = $region86
          $region85: #{tpu_custom_call.1} parent=81 // pred_region
            // Predicated region
            $region87: #{tpu_custom_call.1} parent=85 // pred_check
              _
            $region88: #{tpu_custom_call.1} parent=85 // pred_check_branch
              %373 = sbr.rel (0) target = $region90
            $region89: #{tpu_custom_call.1} parent=85 // pred_region
              // Predicated region
              $region102: #{tpu_custom_call.1} parent=89 // pred_check
                _
              $region103: #{tpu_custom_call.1} parent=89 // pred_check_branch
                %394 = sbr.rel (0) target = $region105
              $region104: #{tpu_custom_call.1} parent=89 // pred_region
                loop: start=0, step=1, limit=1
                $region106: #{tpu_custom_call.1} parent=104 // loop_pre_header
                  _
                $region107: #{tpu_custom_call.1} parent=104 // loop_header
                  %s396 = sphi 0, %s400
                  %p397 = scmp.ge.s32.totalorder %s396, 1
                  %s401 = sphi %s369, %s369
                  %s402 = sphi %s363, %s363
                $region108: #{tpu_custom_call.1} parent=104 // loop_header_branch
                  %399 = sbr.rel (%p397) target = $region112
                $region109: #{tpu_custom_call.1} parent=104 // loop_body
                  %v403 = vld [vmem:[%s401] sm:$0xff]
                  %404 = vst [vmem:[%s402] sm:$0xff] %v403
                  %v405 = vld [vmem:[%s401 + $0x8] sm:$0xff]
                  %406 = vst [vmem:[%s402 + $0x8] sm:$0xff] %v405
                  %v407 = vld [vmem:[%s401 + $0x40] sm:$0xff]
                  %408 = vst [vmem:[%s402 + $0x10] sm:$0xff] %v407
                  %v409 = vld [vmem:[%s401 + $0x48] sm:$0xff]
                  %410 = vst [vmem:[%s402 + $0x18] sm:$0xff] %v409
                $region110: #{tpu_custom_call.1} parent=104 // loop_footer
                  %s400 = sadd.s32 1, %s396
                $region111: #{tpu_custom_call.1} parent=104 // loop_footer_branch
                  %395 = sbr.rel target = $region107
                $region112: #{tpu_custom_call.1} parent=104 // loop_exit
                  _
              $region105: #{tpu_custom_call.1} parent=89 // pred_fallthru
                _
              // Predicated region
              $region113: #{tpu_custom_call.1} parent=89 // pred_check
                _
              $region114: #{tpu_custom_call.1} parent=89 // pred_check_branch
                %412 = sbr.rel target = $region116
              $region115: #{tpu_custom_call.1} parent=89 // pred_region
                _
              $region116: #{tpu_custom_call.1} parent=89 // pred_fallthru
                _
            $region90: #{tpu_custom_call.1} parent=85 // pred_fallthru
              _
            // Predicated region
            $region91: #{tpu_custom_call.1} parent=85 // pred_check
              _
            $region92: #{tpu_custom_call.1} parent=85 // pred_check_branch
              %375 = sbr.rel target = $region94
            $region93: #{tpu_custom_call.1} parent=85 // pred_region
              loop: start=0, step=1, limit=1
              $region95: #{tpu_custom_call.1} parent=93 // loop_pre_header
                _
              $region96: #{tpu_custom_call.1} parent=93 // loop_header
                %s378 = sphi 0, %s382
                %p379 = scmp.ge.s32.totalorder %s378, 1
                %s383 = sphi %s369, %s369
                %s384 = sphi %s363, %s363
              $region97: #{tpu_custom_call.1} parent=93 // loop_header_branch
                %381 = sbr.rel (%p379) target = $region101
              $region98: #{tpu_custom_call.1} parent=93 // loop_body
                %v385 = vld [vmem:[%s383] sm:$0xff]
                %386 = vst [vmem:[%s384] sm:$0xff] %v385
                %v387 = vld [vmem:[%s383 + $0x8] sm:$0xff]
                %388 = vst [vmem:[%s384 + $0x8] sm:$0xff] %v387
                %v389 = vld [vmem:[%s383 + $0x40] sm:$0xff]
                %390 = vst [vmem:[%s384 + $0x10] sm:$0xff] %v389
                %v391 = vld [vmem:[%s383 + $0x48] sm:$0xff]
                %392 = vst [vmem:[%s384 + $0x18] sm:$0xff] %v391
              $region99: #{tpu_custom_call.1} parent=93 // loop_footer
                %s382 = sadd.s32 1, %s378
              $region100: #{tpu_custom_call.1} parent=93 // loop_footer_branch
                %377 = sbr.rel target = $region96
              $region101: #{tpu_custom_call.1} parent=93 // loop_exit
                _
            $region94: #{tpu_custom_call.1} parent=85 // pred_fallthru
              _
          $region86: #{tpu_custom_call.1} parent=81 // pred_fallthru
            _
          %413 = vnop
        $region82: #{tpu_custom_call.1} parent=39 // pred_fallthru
          _
      $region40: #{tpu_custom_call.1} parent=5 // pred_fallthru
        _
      %p414 = scmp.le.s32.totalorder 1, %s17
      %p415 = scmp.lt.s32.totalorder %s17, 5
      %p416 = pnand %p414, %p415
      %p417 = pneg %p416
      // Predicated region
      $region117: #{tpu_custom_call.1} parent=5 // pred_check
        _
      $region118: #{tpu_custom_call.1} parent=5 // pred_check_branch
        %419 = sbr.rel (%p416) target = $region120
      $region119: #{tpu_custom_call.1} parent=5 // pred_region
        %s420 = ssub.s32 %s17, 1
        %s421 = sand.u32 %s44, 1
        %s422 = sand.u32 %s44, 1
        %s423 = smul.addr %s422, 32
        %s424 = scalar_lea.vmem [#allocation4], %s423
        // Predicated region
        $region121: #{tpu_custom_call.1} parent=119 // pred_check
          %p425 = pneg %p57
        $region122: #{tpu_custom_call.1} parent=119 // pred_check_branch
          %427 = sbr.rel (%p425) target = $region124
        $region123: #{tpu_custom_call.1} parent=119 // pred_region
          _
        $region124: #{tpu_custom_call.1} parent=119 // pred_fallthru
          _
        %s428 = sand.u32 %s72, 1
        %s429 = sand.u32 %s72, 1
        %s430 = smul.addr %s429, 32
        %s431 = scalar_lea.vmem [#allocation5], %s430
        // Predicated region
        $region125: #{tpu_custom_call.1} parent=119 // pred_check
          %p432 = pneg %p85
        $region126: #{tpu_custom_call.1} parent=119 // pred_check_branch
          %434 = sbr.rel (%p432) target = $region128
        $region127: #{tpu_custom_call.1} parent=119 // pred_region
          _
        $region128: #{tpu_custom_call.1} parent=119 // pred_fallthru
          _
        %s435 = sand.u32 %s44, 1
        %s436 = sand.u32 %s44, 1
        %s437 = smul.addr %s436, 32
        %s438 = scalar_lea.vmem [#allocation4], %s437
        %p439 = pneg %p57
        %p440 = pneg %p54
        %s441 = sand.u32 %s72, 1
        %s442 = sand.u32 %s72, 1
        %s443 = smul.addr %s442, 32
        %s444 = scalar_lea.vmem [#allocation5], %s443
        %p445 = pneg %p85
        %p446 = pneg %p82
        %p447 = pneg %p106
        %p448 = pneg %p103
        %p449 = pneg %p127
        %p450 = pneg %p124
        %p451 = pneg %p148
        %p452 = pneg %p145
        %p453 = pneg %p169
        %p454 = pneg %p166
        %p455 = pneg %p190
        %p456 = pneg %p187
        %p457 = pneg %p211
        %p458 = pneg %p208
        %p459 = pneg %p237
        %p460 = pneg %p234
        %p461 = pneg %p263
        %p462 = pneg %p260
        %p463 = scmp.lt.s32.totalorder %s26, 0
        %s464 = scalar_select %p463, %s26, 0
        %s465 = smul.addr %s464, 2
        %s466 = scalar_lea.vmem %s9, %s465
        %s467 = smul.u32 2, %s26
        %s468 = smul.u32 2, %s27
        %s469 = smul.u32 2, %s26
        %s470 = smul.u32 2, %s27
        %p471 = scmp.lt.s32.totalorder %s26, 0
        %s472 = scalar_select %p471, %s26, 0
        %s473 = smul.addr %s472, 2
        %s474 = scalar_lea.vmem %s9, %s473
        %p475 = scmp.eq.s32.totalorder %s27, 0
        // Predicated region
        $region129: #{tpu_custom_call.1} parent=119 // pred_check
          %p476 = pneg %p475
        $region130: #{tpu_custom_call.1} parent=119 // pred_check_branch
          %478 = sbr.rel (%p476) target = $region132
        $region131: #{tpu_custom_call.1} parent=119 // pred_region
          %vm479 = vcmask 254976
          %480 = vst.msk [vmem:[#allocation2] sm:$0x3] %vm479, 0.0
          %vm481 = vcmask 1024
          %482 = vst.msk [vmem:[#allocation3] sm:$0x3] %vm481, 0.0
        $region132: #{tpu_custom_call.1} parent=119 // pred_fallthru
          _
        %v483 = vld [vmem:[%s424] sm:$0xff]
        %v484 = vld [vmem:[%s424 + $0x8] sm:$0xff]
        %v485 = vld [vmem:[%s424 + $0x10] sm:$0xff]
        %v486 = vld [vmem:[%s424 + $0x18] sm:$0xff]
        %v487 = vld [vmem:[%s431] sm:$0xff]
        %v488 = vld [vmem:[%s431 + $0x8] sm:$0xff]
        %v489 = vld [vmem:[%s431 + $0x10] sm:$0xff]
        %v490 = vld [vmem:[%s431 + $0x18] sm:$0xff]
        %492 = vset.pattern.permute.xlu0 0
        %493 = vperm.xlu0 %492, %v487
        %v494 = vpop.permute.xlu0 %493
        %497 = vset.pattern.permute.xlu0 0
        %498 = vperm.xlu0 %497, %v488
        %v499 = vpop.permute.xlu0 %498
        %502 = vset.pattern.permute.xlu0 0
        %503 = vperm.xlu0 %502, %v489
        %v504 = vpop.permute.xlu0 %503
        %507 = vset.pattern.permute.xlu0 0
        %508 = vperm.xlu0 %507, %v490
        %v509 = vpop.permute.xlu0 %508
        %v511 = vmul.f32 %v483, %v494
        %v512 = vmul.f32 %v484, %v499
        %v513 = vmul.f32 %v485, %v504
        %v514 = vmul.f32 %v486, %v509
        %v515 = vld [vmem:[#allocation2] sm:$0x3]
        %vm516 = vcmask 261120
        %v517 = vsel %vm516, %v511, 0.0
        %v518 = vsel %vm516, %v512, 0.0
        %v519 = vadd.f32 %v517, %v518
        %v520 = vrot.slane %v519, 4
        %v521 = vadd.f32 %v519, %v520
        %v522 = vrot.slane %v521, 2
        %v523 = vadd.f32 %v521, %v522
        %v524 = vrot.slane %v523, 1
        %v525 = vadd.f32 %v523, %v524
        %v526 = vsel %vm516, %v513, 0.0
        %v527 = vsel %vm516, %v514, 0.0
        %v528 = vadd.f32 %v526, %v527
        %v529 = vrot.slane %v528, 4
        %v530 = vadd.f32 %v528, %v529
        %v531 = vrot.slane %v530, 2
        %v532 = vadd.f32 %v530, %v531
        %v533 = vrot.slane %v532, 1
        %v534 = vadd.f32 %v532, %v533
        %vm537 = vcmask 1041409
        %v538 = vsel %vm537, %v534, %v525
        %v540 = vadd.f32 %v515, %v538
        %vm541 = vcmask 254976
        %542 = vst.msk [vmem:[#allocation2] sm:$0x3] %vm541, %v540
        %v543 = vld [vmem:[#allocation3] sm:$0x3]
        %vm544 = vcmask 7168
        %v545 = vsel %vm544, %v487, 0.0
        %v546 = vsel %vm544, %v488, 0.0
        %v547 = vadd.f32 %v545, %v546
        %v548 = vrot.slane %v547, 4
        %v549 = vadd.f32 %v547, %v548
        %v550 = vrot.slane %v549, 2
        %v551 = vadd.f32 %v549, %v550
        %v552 = vrot.slane %v551, 1
        %v553 = vadd.f32 %v551, %v552
        %v554 = vsel %vm544, %v489, 0.0
        %v555 = vsel %vm544, %v490, 0.0
        %v556 = vadd.f32 %v554, %v555
        %v557 = vrot.slane %v556, 4
        %v558 = vadd.f32 %v556, %v557
        %v559 = vrot.slane %v558, 2
        %v560 = vadd.f32 %v558, %v559
        %v561 = vrot.slane %v560, 1
        %v562 = vadd.f32 %v560, %v561
        %v565 = vsel %vm537, %v562, %v553
        %v567 = vadd.f32 %v543, %v565
        %vm568 = vcmask 1024
        %569 = vst.msk [vmem:[#allocation3] sm:$0x3] %vm568, %v567
        %p570 = scmp.eq.s32.totalorder %s27, 3
        // Predicated region
        $region133: #{tpu_custom_call.1} parent=119 // pred_check
          %p571 = pneg %p570
        $region134: #{tpu_custom_call.1} parent=119 // pred_check_branch
          %573 = sbr.rel (%p571) target = $region136
        $region135: #{tpu_custom_call.1} parent=119 // pred_region
          %v574 = vld [vmem:[#allocation2] sm:$0x3]
          %v575 = vld [vmem:[#allocation3] sm:$0x3]
          %577 = vset.pattern.permute.xlu0 0
          %578 = vperm.xlu0 %577, %v575
          %v579 = vpop.permute.xlu0 %578
          %v581 = vrcp.pop %v579
          %v582 = vmul.f32 %v574, %v581
          %v583 = vld [vmem:[%s2] sm:$0xff]
          %v584 = vld [vmem:[%s2 + $0x8] sm:$0xff]
          %v585 = vld [vmem:[%s2 + $0x10] sm:$0xff]
          %v586 = vld [vmem:[%s2 + $0x18] sm:$0xff]
          %v587 = vld [vmem:[%s3] sm:$0x1]
          %v589 = vlaneseq
          %v590 = vshrl.u32 %v589, 7
          %v591 = vsub.s32 0, %v590
          %v592 = vrot.slane %v587, %v591
          %v595 = vsel %vm516, %v582, 0
          %597 = vmatprep.subr.mxu0 0.0
          %598 = vmatpush1.msra.mxu0 %v583
          %599 = vmatprep.subr.mxu0 0.0
          %600 = vmatpush1.msra.mxu0 %v584
          %601 = vmatprep.subr.mxu0 0.0
          %602 = vmatpush1.msra.mxu0 %v585
          %603 = vmatprep.subr.mxu0 0.0
          %604 = vmatpush1.msra.mxu0 %v586
          %605 = vmatprep.subr.mxu0 0.0
          %606 = vmatpush1.msra.mxu0 0.0
          %607 = vmatprep.subr.mxu0 0.0
          %608 = vmatpush1.msra.mxu0 0.0
          %609 = vmatprep.subr.mxu0 0.0
          %610 = vmatpush1.msra.mxu0 0.0
          %611 = vmatprep.subr.mxu0 0.0
          %612 = vmatpush1.msra.mxu0 0.0
          %613 = vmatprep.subr.mxu0 0.0
          %614 = vmatpush1.msra.mxu0 0.0
          %615 = vmatprep.subr.mxu0 0.0
          %616 = vmatpush1.msra.mxu0 0.0
          %617 = vmatprep.subr.mxu0 0.0
          %618 = vmatpush1.msra.mxu0 0.0
          %619 = vmatprep.subr.mxu0 0.0
          %620 = vmatpush1.msra.mxu0 0.0
          %621 = vmatprep.subr.mxu0 0.0
          %622 = vmatpush1.msra.mxu0 0.0
          %623 = vmatprep.subr.mxu0 0.0
          %624 = vmatpush1.msra.mxu0 0.0
          %625 = vmatprep.subr.mxu0 0.0
          %626 = vmatpush1.msra.mxu0 0.0
          %627 = vmatprep.subr.mxu0 0.0
          %628 = vmatpush1.msra.mxu0 0.0
          %629 = vmatprep.subr.mxu0 0.0
          %630 = vmatpush1.msra.mxu0 0.0
          %631 = vmatprep.subr.mxu0 0.0
          %632 = vmatpush1.msra.mxu0 0.0
          %633 = vmatprep.subr.mxu0 0.0
          %634 = vmatpush1.msra.mxu0 0.0
          %635 = vmatprep.subr.mxu0 0.0
          %636 = vmatpush1.msra.mxu0 0.0
          %637 = vmatprep.subr.mxu0 0.0
          %638 = vmatpush1.msra.mxu0 0.0
          %639 = vmatprep.subr.mxu0 0.0
          %640 = vmatpush1.msra.mxu0 0.0
          %641 = vmatprep.subr.mxu0 0.0
          %642 = vmatpush1.msra.mxu0 0.0
          %643 = vmatprep.subr.mxu0 0.0
          %644 = vmatpush1.msra.mxu0 0.0
          %645 = vmatprep.subr.mxu0 0.0
          %646 = vmatpush1.msra.mxu0 0.0
          %647 = vmatprep.subr.mxu0 0.0
          %648 = vmatpush1.msra.mxu0 0.0
          %649 = vmatprep.subr.mxu0 0.0
          %650 = vmatpush1.msra.mxu0 0.0
          %651 = vmatprep.subr.mxu0 0.0
          %652 = vmatpush1.msra.mxu0 0.0
          %653 = vmatprep.subr.mxu0 0.0
          %654 = vmatpush1.msra.mxu0 0.0
          %655 = vmatprep.subr.mxu0 0.0
          %656 = vmatpush1.msra.mxu0 0.0
          %657 = vmatprep.subr.mxu0 0.0
          %658 = vmatpush1.msra.mxu0 0.0
          %659 = vmatprep.subr.mxu0 0.0
          %660 = vmatpush1.msra.mxu0 0.0
          %661 = vmatprep.mubr.f32.mxu0 0.0
          %662 = vmatmul.mubr.f32.gmra.mrb[0].mxu0 %v595
          %v663 = vpop.f32.mrb[0].mxu0
          %v664 = vadd.f32 %v592, %v663
          %v665 = vpop.f32.mrb[0].mxu0
          %666 = vdwg.mxu0
          %v667 = vmul.f32 %v664, 0.5
          %v668 = vmul.f32 %v664, 0.70710677
          %v669 = verf.f32.pop %v668
          %v670 = vadd.f32 %v669, 1.0
          %v671 = vmul.f32 %v667, %v670
          %v672 = vld [vmem:[%s4] sm:$0xff]
          %v673 = vld [vmem:[%s4 + $0x8] sm:$0xff]
          %v674 = vld [vmem:[%s4 + $0x10] sm:$0xff]
          %v675 = vld [vmem:[%s4 + $0x18] sm:$0xff]
          %v676 = vld [vmem:[%s5] sm:$0x1]
          %v678 = vlaneseq
          %v679 = vshrl.u32 %v678, 7
          %v680 = vsub.s32 0, %v679
          %v681 = vrot.slane %v676, %v680
          %v684 = vsel %vm516, %v671, 0
          %686 = vmatprep.subr.mxu0 0.0
          %687 = vmatpush1.msra.mxu0 %v672
          %688 = vmatprep.subr.mxu0 0.0
          %689 = vmatpush1.msra.mxu0 %v673
          %690 = vmatprep.subr.mxu0 0.0
          %691 = vmatpush1.msra.mxu0 %v674
          %692 = vmatprep.subr.mxu0 0.0
          %693 = vmatpush1.msra.mxu0 %v675
          %694 = vmatprep.subr.mxu0 0.0
          %695 = vmatpush1.msra.mxu0 0.0
          %696 = vmatprep.subr.mxu0 0.0
          %697 = vmatpush1.msra.mxu0 0.0
          %698 = vmatprep.subr.mxu0 0.0
          %699 = vmatpush1.msra.mxu0 0.0
          %700 = vmatprep.subr.mxu0 0.0
          %701 = vmatpush1.msra.mxu0 0.0
          %702 = vmatprep.subr.mxu0 0.0
          %703 = vmatpush1.msra.mxu0 0.0
          %704 = vmatprep.subr.mxu0 0.0
          %705 = vmatpush1.msra.mxu0 0.0
          %706 = vmatprep.subr.mxu0 0.0
          %707 = vmatpush1.msra.mxu0 0.0
          %708 = vmatprep.subr.mxu0 0.0
          %709 = vmatpush1.msra.mxu0 0.0
          %710 = vmatprep.subr.mxu0 0.0
          %711 = vmatpush1.msra.mxu0 0.0
          %712 = vmatprep.subr.mxu0 0.0
          %713 = vmatpush1.msra.mxu0 0.0
          %714 = vmatprep.subr.mxu0 0.0
          %715 = vmatpush1.msra.mxu0 0.0
          %716 = vmatprep.subr.mxu0 0.0
          %717 = vmatpush1.msra.mxu0 0.0
          %718 = vmatprep.subr.mxu0 0.0
          %719 = vmatpush1.msra.mxu0 0.0
          %720 = vmatprep.subr.mxu0 0.0
          %721 = vmatpush1.msra.mxu0 0.0
          %722 = vmatprep.subr.mxu0 0.0
          %723 = vmatpush1.msra.mxu0 0.0
          %724 = vmatprep.subr.mxu0 0.0
          %725 = vmatpush1.msra.mxu0 0.0
          %726 = vmatprep.subr.mxu0 0.0
          %727 = vmatpush1.msra.mxu0 0.0
          %728 = vmatprep.subr.mxu0 0.0
          %729 = vmatpush1.msra.mxu0 0.0
          %730 = vmatprep.subr.mxu0 0.0
          %731 = vmatpush1.msra.mxu0 0.0
          %732 = vmatprep.subr.mxu0 0.0
          %733 = vmatpush1.msra.mxu0 0.0
          %734 = vmatprep.subr.mxu0 0.0
          %735 = vmatpush1.msra.mxu0 0.0
          %736 = vmatprep.subr.mxu0 0.0
          %737 = vmatpush1.msra.mxu0 0.0
          %738 = vmatprep.subr.mxu0 0.0
          %739 = vmatpush1.msra.mxu0 0.0
          %740 = vmatprep.subr.mxu0 0.0
          %741 = vmatpush1.msra.mxu0 0.0
          %742 = vmatprep.subr.mxu0 0.0
          %743 = vmatpush1.msra.mxu0 0.0
          %744 = vmatprep.subr.mxu0 0.0
          %745 = vmatpush1.msra.mxu0 0.0
          %746 = vmatprep.subr.mxu0 0.0
          %747 = vmatpush1.msra.mxu0 0.0
          %748 = vmatprep.subr.mxu0 0.0
          %749 = vmatpush1.msra.mxu0 0.0
          %750 = vmatprep.mubr.f32.mxu0 0.0
          %751 = vmatmul.mubr.f32.gmra.mrb[0].mxu0 %v684
          %v752 = vpop.f32.mrb[0].mxu0
          %v753 = vadd.f32 %v681, %v752
          %v754 = vpop.f32.mrb[0].mxu0
          %755 = vdwg.mxu0
          %v756 = vld [vmem:[%s6] sm:$0xff]
          %v757 = vld [vmem:[%s6 + $0x8] sm:$0xff]
          %v758 = vld [vmem:[%s6 + $0x10] sm:$0xff]
          %v759 = vld [vmem:[%s6 + $0x18] sm:$0xff]
          %v760 = vld [vmem:[%s7] sm:$0x1]
          %v762 = vlaneseq
          %v763 = vshrl.u32 %v762, 7
          %v764 = vsub.s32 0, %v763
          %v765 = vrot.slane %v760, %v764
          %v768 = vsel %vm516, %v753, 0
          %770 = vmatprep.subr.mxu0 0.0
          %771 = vmatpush1.msra.mxu0 %v756
          %772 = vmatprep.subr.mxu0 0.0
          %773 = vmatpush1.msra.mxu0 %v757
          %774 = vmatprep.subr.mxu0 0.0
          %775 = vmatpush1.msra.mxu0 %v758
          %776 = vmatprep.subr.mxu0 0.0
          %777 = vmatpush1.msra.mxu0 %v759
          %778 = vmatprep.subr.mxu0 0.0
          %779 = vmatpush1.msra.mxu0 0.0
          %780 = vmatprep.subr.mxu0 0.0
          %781 = vmatpush1.msra.mxu0 0.0
          %782 = vmatprep.subr.mxu0 0.0
          %783 = vmatpush1.msra.mxu0 0.0
          %784 = vmatprep.subr.mxu0 0.0
          %785 = vmatpush1.msra.mxu0 0.0
          %786 = vmatprep.subr.mxu0 0.0
          %787 = vmatpush1.msra.mxu0 0.0
          %788 = vmatprep.subr.mxu0 0.0
          %789 = vmatpush1.msra.mxu0 0.0
          %790 = vmatprep.subr.mxu0 0.0
          %791 = vmatpush1.msra.mxu0 0.0
          %792 = vmatprep.subr.mxu0 0.0
          %793 = vmatpush1.msra.mxu0 0.0
          %794 = vmatprep.subr.mxu0 0.0
          %795 = vmatpush1.msra.mxu0 0.0
          %796 = vmatprep.subr.mxu0 0.0
          %797 = vmatpush1.msra.mxu0 0.0
          %798 = vmatprep.subr.mxu0 0.0
          %799 = vmatpush1.msra.mxu0 0.0
          %800 = vmatprep.subr.mxu0 0.0
          %801 = vmatpush1.msra.mxu0 0.0
          %802 = vmatprep.subr.mxu0 0.0
          %803 = vmatpush1.msra.mxu0 0.0
          %804 = vmatprep.subr.mxu0 0.0
          %805 = vmatpush1.msra.mxu0 0.0
          %806 = vmatprep.subr.mxu0 0.0
          %807 = vmatpush1.msra.mxu0 0.0
          %808 = vmatprep.subr.mxu0 0.0
          %809 = vmatpush1.msra.mxu0 0.0
          %810 = vmatprep.subr.mxu0 0.0
          %811 = vmatpush1.msra.mxu0 0.0
          %812 = vmatprep.subr.mxu0 0.0
          %813 = vmatpush1.msra.mxu0 0.0
          %814 = vmatprep.subr.mxu0 0.0
          %815 = vmatpush1.msra.mxu0 0.0
          %816 = vmatprep.subr.mxu0 0.0
          %817 = vmatpush1.msra.mxu0 0.0
          %818 = vmatprep.subr.mxu0 0.0
          %819 = vmatpush1.msra.mxu0 0.0
          %820 = vmatprep.subr.mxu0 0.0
          %821 = vmatpush1.msra.mxu0 0.0
          %822 = vmatprep.subr.mxu0 0.0
          %823 = vmatpush1.msra.mxu0 0.0
          %824 = vmatprep.subr.mxu0 0.0
          %825 = vmatpush1.msra.mxu0 0.0
          %826 = vmatprep.subr.mxu0 0.0
          %827 = vmatpush1.msra.mxu0 0.0
          %828 = vmatprep.subr.mxu0 0.0
          %829 = vmatpush1.msra.mxu0 0.0
          %830 = vmatprep.subr.mxu0 0.0
          %831 = vmatpush1.msra.mxu0 0.0
          %832 = vmatprep.subr.mxu0 0.0
          %833 = vmatpush1.msra.mxu0 0.0
          %834 = vmatprep.mubr.f32.mxu0 0.0
          %835 = vmatmul.mubr.f32.gmra.mrb[0].mxu0 %v768
          %v836 = vpop.f32.mrb[0].mxu0
          %v837 = vadd.f32 %v765, %v836
          %v838 = vpop.f32.mrb[0].mxu0
          %839 = vdwg.mxu0
          %v840 = vxor.u32 %v837, 2147483648
          %v841 = vmul.f32 %v840, 1.442695
          %v842 = vpow.pop %v841
          %v843 = vadd.f32 %v842, 1.0
          %v844 = vrcp.pop %v843
          %v845 = vmul.f32 1.0, %v844
          %846 = vst [vmem:[#allocation6] sm:$0x3] %v845
          %v847 = vlaneseq
          %v848 = vand.u32 %v847, 127
          %vm849 = vcmp.lt.s32.totalorder %v848, 12
          %v850 = vsel %vm849, 1, 0
          %v851 = vcvt.s32.f32 %v850
          %v852 = vmul.f32 %v845, %v851
          %vm853 = vcmask 1041408
          %v854 = vsel %vm853, %v852, 0.0
          %855 = vadd.xlane.f32.xlu0 %v854
          %v856 = vpop.xlane.xlu0 %855
          %v857 = vrcp.pop 12.0
          %v858 = vmul.f32 %v856, %v857
          %859 = vst.msk [vmem:[%s474] sm:$0x3] %vm568, %v858
        $region136: #{tpu_custom_call.1} parent=119 // pred_fallthru
          _
        %p860 = scmp.lt.s32.totalorder %s26, 0
        %s861 = scalar_select %p860, %s26, 0
        %s862 = smul.addr %s861, 2
        %s863 = scalar_lea.vmem %s9, %s862
        // Predicated region
        $region137: #{tpu_custom_call.1} parent=119 // pred_check
          %p864 = pneg %p234
        $region138: #{tpu_custom_call.1} parent=119 // pred_check_branch
          %866 = sbr.rel (%p864) target = $region140
        $region139: #{tpu_custom_call.1} parent=119 // pred_region
          %s868 = ssub.s32 32, 32
          %869 = vsyncadd [#allocation7], %s868
          %s870 = smul.addr %s26, 32
          %s871 = scalar_lea.hbm %s8, %s870
          %s873 = sshll.u32 [#allocation6], 4
          %s874 = int_to_ptr.vmem [resolvable:$true] %s873
          %876 = dma.vmem_to_hbm [thread:$0]  %s874, 32, %s871, [#allocation7]
        $region140: #{tpu_custom_call.1} parent=119 // pred_fallthru
          _
        // Predicated region
        $region141: #{tpu_custom_call.1} parent=119 // pred_check
          %p877 = pneg %p260
        $region142: #{tpu_custom_call.1} parent=119 // pred_check_branch
          %879 = sbr.rel (%p877) target = $region144
        $region143: #{tpu_custom_call.1} parent=119 // pred_region
          _
        $region144: #{tpu_custom_call.1} parent=119 // pred_fallthru
          _
        // Predicated region
        $region145: #{tpu_custom_call.1} parent=119 // pred_check
          %p880 = pneg %p234
        $region146: #{tpu_custom_call.1} parent=119 // pred_check_branch
          %882 = sbr.rel (%p880) target = $region148
        $region147: #{tpu_custom_call.1} parent=119 // pred_region
          %883 = dma.done [#allocation7], 32
        $region148: #{tpu_custom_call.1} parent=119 // pred_fallthru
          _
        // Predicated region
        $region149: #{tpu_custom_call.1} parent=119 // pred_check
          %p884 = pneg %p260
        $region150: #{tpu_custom_call.1} parent=119 // pred_check_branch
          %886 = sbr.rel (%p884) target = $region152
        $region151: #{tpu_custom_call.1} parent=119 // pred_region
          %p887 = scmp.lt.s32.totalorder %s26, 0
          %s888 = scalar_select %p887, %s26, 0
          %s889 = smul.addr %s888, 2
          %s890 = scalar_lea.vmem %s9, %s889
        $region152: #{tpu_custom_call.1} parent=119 // pred_fallthru
          _
      $region120: #{tpu_custom_call.1} parent=5 // pred_fallthru
        _
      %p891 = scmp.le.s32.totalorder 2, %s17
      // Predicated region
      $region153: #{tpu_custom_call.1} parent=5 // pred_check
        %p892 = pneg %p891
      $region154: #{tpu_custom_call.1} parent=5 // pred_check_branch
        %894 = sbr.rel (%p892) target = $region156
      $region155: #{tpu_custom_call.1} parent=5 // pred_region
        %s895 = ssub.s32 %s17, 2
      $region156: #{tpu_custom_call.1} parent=5 // pred_fallthru
        _
    $region6: #{tpu_custom_call.1} parent=1 // loop_footer
      %s21 = sadd.s32 1, %s17
    $region7: #{tpu_custom_call.1} parent=1 // loop_footer_branch
      %16 = sbr.rel target = $region3
    $region8: #{tpu_custom_call.1} parent=1 // loop_exit
      _
    %896 = vsyncpa [#allocation7], 1
    %s897 = scalar_lea.sflag [#allocation7], 1
    %898 = vsyncpa %s897, 1

</llo_original>
